<compile_context>
chip_gen: v7x
topology: tpu7x:2x2x1
jax: 0.10.0
libtpu: 0.0.40
codegen_flags: <defaults>
</compile_context>

<pallas_src>
import functools

import jax
import jax.numpy as jnp
from jax.experimental import pallas as pl
from jax.experimental.pallas import tpu as pltpu


def _round_up(x, m):
    return ((x + m - 1) // m) * m


# ----------------------------------------------------------------------------
# Pallas kernel: fused  (W_scaled @ patches)  ->  + shift  ->  ReLU
# ----------------------------------------------------------------------------
def _gemm_bn_relu_kernel(w_ref, p_ref, shift_ref, o_ref):
    # w_ref     : (Coutp, Kp)   bf16, BN scale pre-folded
    # p_ref     : (Kp, tm)      bf16 im2col patches tile (M = N*Ho*Wo, lane-dense)
    # shift_ref : (Coutp, 1)    f32 folded BN shift
    # o_ref     : (Coutp, tm)   f32 output tile
    acc = jnp.dot(w_ref[...], p_ref[...], preferred_element_type=jnp.float32)
    y = jnp.maximum(acc + shift_ref[...], 0.0)
    o_ref[...] = y.astype(o_ref.dtype)


def conv_bn_relu_pallas(x_cnhw, w_oihw, scale, shift, stride):
    """3x3 conv (padding=1, given stride, no bias) + folded BN + ReLU.

    x_cnhw: activations in channel-major (Cin, N, H, W) layout.
    Returns (Cout, N, Ho, Wo).
    """
    Cin, N, H, W = x_cnhw.shape
    Cout, Cin_w, KH, KW = w_oihw.shape
    assert Cin == Cin_w and KH == 3 and KW == 3
    pad = 1
    Ho = (H + 2 * pad - KH) // stride + 1
    Wo = (W + 2 * pad - KW) // stride + 1

    # --- glue: pad + im2col (bf16 to halve the 9x patch HBM traffic) ---------
    xb = x_cnhw.astype(jnp.bfloat16)
    xp = jnp.pad(xb, ((0, 0), (0, 0), (pad, pad), (pad, pad)))
    cols = []
    for kh in range(KH):
        for kw in range(KW):
            cols.append(
                xp[:, :,
                   kh:kh + stride * (Ho - 1) + 1:stride,
                   kw:kw + stride * (Wo - 1) + 1:stride])
    # K ordering = (kh, kw, cin); M ordering = (n, ho, wo)
    K = KH * KW * Cin
    Mtot = N * Ho * Wo
    patches = jnp.concatenate(cols, axis=0).reshape(K, Mtot)

    # weight (Cout, Cin, KH, KW): fold BN scale, reorder to (Cout, K)
    w_scaled = w_oihw.astype(jnp.float32) * scale[:, None, None, None]
    w2 = jnp.transpose(w_scaled, (0, 2, 3, 1)).reshape(Cout, K)

    # --- pad to TPU-friendly tiles -------------------------------------------
    tm = min(256, _round_up(Mtot, 128))          # lane-dense M tile
    Mpad = _round_up(Mtot, tm)
    Kp = _round_up(K, 8)
    Coutp = _round_up(Cout, 8)

    patches_p = jnp.pad(patches, ((0, Kp - K), (0, Mpad - Mtot)))
    w2_p = jnp.pad(w2, ((0, Coutp - Cout), (0, Kp - K))).astype(jnp.bfloat16)
    shift_p = jnp.pad(shift.astype(jnp.float32), (0, Coutp - Cout)).reshape(Coutp, 1)

    out = pl.pallas_call(
        _gemm_bn_relu_kernel,
        out_shape=jax.ShapeDtypeStruct((Coutp, Mpad), jnp.float32),
        grid_spec=pltpu.PrefetchScalarGridSpec(
            num_scalar_prefetch=0,
            grid=(Mpad // tm,),
            in_specs=[
                pl.BlockSpec((Coutp, Kp), lambda m: (0, 0)),   # weights (resident)
                pl.BlockSpec((Kp, tm), lambda m: (0, m)),      # patch M-tile
                pl.BlockSpec((Coutp, 1), lambda m: (0, 0)),    # BN shift
            ],
            out_specs=pl.BlockSpec((Coutp, tm), lambda m: (0, m)),
        ),
        compiler_params=pltpu.CompilerParams(
            dimension_semantics=("parallel",)),
    )(w2_p, patches_p, shift_p)

    return out[:Cout, :Mtot].reshape(Cout, N, Ho, Wo)


# ----------------------------------------------------------------------------
# MSDNFirstLayer (cifar branch): stride-1 ConvBasic then (nScales-1) stride-2
# ----------------------------------------------------------------------------
def init_msdn_first_layer_params(key, n_in, n_out, gr_factor, n_scales,
                                 eps=1e-5):
    params = []
    strides = []
    cin = n_in
    for i in range(n_scales):
        cout = n_out * gr_factor[i]
        stride = 1 if i == 0 else 2
        key, kw, kg, kb, km, kv = jax.random.split(key, 6)
        fan_in = cin * 9
        w = jax.random.normal(kw, (cout, cin, 3, 3), jnp.float32) / jnp.sqrt(
            jnp.float32(fan_in))
        gamma = 1.0 + 0.1 * jax.random.normal(kg, (cout,), jnp.float32)
        beta = 0.1 * jax.random.normal(kb, (cout,), jnp.float32)
        running_mean = 0.1 * jax.random.normal(km, (cout,), jnp.float32)
        running_var = 1.0 + 0.1 * jnp.abs(
            jax.random.normal(kv, (cout,), jnp.float32))
        scale = gamma / jnp.sqrt(running_var + eps)
        shift = beta - running_mean * scale
        params.append(dict(w=w, scale=scale, shift=shift,
                           gamma=gamma, beta=beta,
                           mean=running_mean, var=running_var))
        strides.append(stride)
        cin = cout
    return params, strides


def msdn_first_layer_forward(x_nchw, params, strides):
    """Returns a list of per-scale feature maps (NCHW), like the torch module."""
    # NCHW -> channel-major (C, N, H, W): matches the transposed (lane-dense)
    # GEMM output layout so no per-layer re-transpose is needed on the chain.
    x = jnp.transpose(x_nchw, (1, 0, 2, 3))
    res = []
    for p, s in zip(params, strides):
        x = conv_bn_relu_pallas(x, p["w"], p["scale"], p["shift"], s)
        res.append(jnp.transpose(x, (1, 0, 2, 3)))  # CNHW -> NCHW
    return res


# ----------------------------------------------------------------------------
# Reference (same bf16 operand rounding, f32 accumulation) for correctness.
# ----------------------------------------------------------------------------
def _ref_forward(x_nchw, params, strides):
    x = x_nchw
    res = []
    for p, s in zip(params, strides):
        w = (p["w"].astype(jnp.float32)
             * p["scale"][:, None, None, None]).astype(jnp.bfloat16)
        y = jax.lax.conv_general_dilated(
            x.astype(jnp.bfloat16), w, window_strides=(s, s),
            padding=((1, 1), (1, 1)),
            dimension_numbers=("NCHW", "OIHW", "NCHW"),
            preferred_element_type=jnp.float32)
        y = jnp.maximum(y + p["shift"][None, :, None, None], 0.0)
        res.append(y)
        x = y
    return res


if __name__ == "__main__":
    # Small cifar-like config:  args.data='cifar10', nScales=3, grFactor=[1,2,4]
    N, C_IN, HW = 2, 4, 16
    N_OUT = 8
    GR_FACTOR = [1, 2, 4]
    N_SCALES = 3

    key = jax.random.PRNGKey(0)
    key, kx = jax.random.split(key)
    x = jax.random.normal(kx, (N, C_IN, HW, HW), jnp.float32)

    params, strides = init_msdn_first_layer_params(
        key, C_IN, N_OUT, GR_FACTOR, N_SCALES)

    fwd = jax.jit(functools.partial(msdn_first_layer_forward,
                                    params=params, strides=strides))
    outs = fwd(x)
    outs = [jax.block_until_ready(o) for o in outs]

    refs = _ref_forward(x, params, strides)
    expected_shapes = [(N, N_OUT * GR_FACTOR[0], 16, 16),
                       (N, N_OUT * GR_FACTOR[1], 8, 8),
                       (N, N_OUT * GR_FACTOR[2], 4, 4)]
    for o, r, es in zip(outs, refs, expected_shapes):
        assert o.shape == es, (o.shape, es)
        assert jnp.allclose(o, r, rtol=1e-3, atol=1e-3), \
            float(jnp.max(jnp.abs(o - r)))

    print("KERNEL_OK")
</pallas_src>

<mosaic_0001>
module attributes {stable_mosaic.version = 11 : i64} {
  func.func @_gemm_bn_relu_kernel(%arg0: i32, %arg1: memref<8x40xbf16, #tpu.memory_space<vmem>>, %arg2: memref<40x256xbf16, #tpu.memory_space<vmem>>, %arg3: memref<8x1xf32, #tpu.memory_space<vmem>>, %arg4: memref<8x256xf32, #tpu.memory_space<vmem>>) attributes {dimension_semantics = [#tpu.dimension_semantics<parallel>], iteration_bounds = array<i64: 2>, scalar_prefetch = 0 : i64, scratch_operands = 0 : i64, tpu.core_type = #tpu.core_type<tc>, window_params = [{pipeline_mode = #tpu.pipeline_mode<synchronous>, transform_indices = @transform_0, window_bounds = array<i64: 8, 40>}, {transform_indices = @transform_1, window_bounds = array<i64: 40, 256>}, {pipeline_mode = #tpu.pipeline_mode<synchronous>, transform_indices = @transform_2, window_bounds = array<i64: 8, 1>}, {transform_indices = @transform_3, window_bounds = array<i64: 8, 256>}]} {
    %c0 = arith.constant 0 : index
    %c0_0 = arith.constant 0 : index
    %0 = vector.load %arg1[%c0, %c0_0] : memref<8x40xbf16, #tpu.memory_space<vmem>>, vector<8x40xbf16>
    %c0_1 = arith.constant 0 : index
    %c0_2 = arith.constant 0 : index
    %1 = vector.load %arg2[%c0_1, %c0_2] : memref<40x256xbf16, #tpu.memory_space<vmem>>, vector<40x256xbf16>
    %cst = arith.constant dense<0.000000e+00> : vector<8x256xf32>
    %2 = tpu.matmul %0, %1, %cst {dimension_numbers = #tpu.dot_dimension_numbers<[1], [0], [0], [1], [0, 0, 1, 1], [], []>} : vector<8x40xbf16>, vector<40x256xbf16>, vector<8x256xf32> -> vector<8x256xf32>
    %c0_3 = arith.constant 0 : index
    %c0_4 = arith.constant 0 : index
    %3 = vector.load %arg3[%c0_3, %c0_4] : memref<8x1xf32, #tpu.memory_space<vmem>>, vector<8x1xf32>
    %4 = vector.broadcast %3 : vector<8x1xf32> to vector<8x256xf32>
    %5 = arith.addf %2, %4 : vector<8x256xf32>
    %cst_5 = arith.constant 0.000000e+00 : f32
    %6 = vector.broadcast %cst_5 : f32 to vector<8x256xf32>
    %7 = arith.maximumf %5, %6 : vector<8x256xf32>
    %c0_6 = arith.constant 0 : index
    %c0_7 = arith.constant 0 : index
    %8 = vector.load %arg4[%c0_6, %c0_7] : memref<8x256xf32, #tpu.memory_space<vmem>>, vector<8x256xf32>
    tpu.vector_store %arg4[%c0_6, %c0_7], %7 {strides = array<i32>} : memref<8x256xf32, #tpu.memory_space<vmem>>, vector<8x256xf32>,
    return
  }
  func.func @transform_0(%arg0: i32) -> (i32, i32) {
    %c0_i32 = arith.constant 0 : i32
    %c0_i32_0 = arith.constant 0 : i32
    %c0_i32_1 = arith.constant 0 : i32
    return %c0_i32, %c0_i32_0 : i32, i32
  }
  func.func @transform_1(%arg0: i32) -> (i32, i32) {
    %c0_i32 = arith.constant 0 : i32
    %c0_i32_0 = arith.constant 0 : i32
    return %c0_i32, %arg0 : i32, i32
  }
  func.func @transform_2(%arg0: i32) -> (i32, i32) {
    %c0_i32 = arith.constant 0 : i32
    %c0_i32_0 = arith.constant 0 : i32
    %c0_i32_1 = arith.constant 0 : i32
    return %c0_i32, %c0_i32_0 : i32, i32
  }
  func.func @transform_3(%arg0: i32) -> (i32, i32) {
    %c0_i32 = arith.constant 0 : i32
    %c0_i32_0 = arith.constant 0 : i32
    return %c0_i32, %arg0 : i32, i32
  }
}

module attributes {stable_mosaic.version = 11 : i64} {
  func.func @_gemm_bn_relu_kernel(%arg0: i32, %arg1: memref<16x72xbf16, #tpu.memory_space<vmem>>, %arg2: memref<72x128xbf16, #tpu.memory_space<vmem>>, %arg3: memref<16x1xf32, #tpu.memory_space<vmem>>, %arg4: memref<16x128xf32, #tpu.memory_space<vmem>>) attributes {dimension_semantics = [#tpu.dimension_semantics<parallel>], iteration_bounds = array<i64: 1>, scalar_prefetch = 0 : i64, scratch_operands = 0 : i64, tpu.core_type = #tpu.core_type<tc>, window_params = [{pipeline_mode = #tpu.pipeline_mode<synchronous>, transform_indices = @transform_0, window_bounds = array<i64: 16, 72>}, {transform_indices = @transform_1, window_bounds = array<i64: 72, 128>}, {pipeline_mode = #tpu.pipeline_mode<synchronous>, transform_indices = @transform_2, window_bounds = array<i64: 16, 1>}, {transform_indices = @transform_3, window_bounds = array<i64: 16, 128>}]} {
    %c0 = arith.constant 0 : index
    %c0_0 = arith.constant 0 : index
    %0 = vector.load %arg1[%c0, %c0_0] : memref<16x72xbf16, #tpu.memory_space<vmem>>, vector<16x72xbf16>
    %c0_1 = arith.constant 0 : index
    %c0_2 = arith.constant 0 : index
    %1 = vector.load %arg2[%c0_1, %c0_2] : memref<72x128xbf16, #tpu.memory_space<vmem>>, vector<72x128xbf16>
    %cst = arith.constant dense<0.000000e+00> : vector<16x128xf32>
    %2 = tpu.matmul %0, %1, %cst {dimension_numbers = #tpu.dot_dimension_numbers<[1], [0], [0], [1], [0, 0, 1, 1], [], []>} : vector<16x72xbf16>, vector<72x128xbf16>, vector<16x128xf32> -> vector<16x128xf32>
    %c0_3 = arith.constant 0 : index
    %c0_4 = arith.constant 0 : index
    %3 = vector.load %arg3[%c0_3, %c0_4] : memref<16x1xf32, #tpu.memory_space<vmem>>, vector<16x1xf32>
    %4 = vector.broadcast %3 : vector<16x1xf32> to vector<16x128xf32>
    %5 = arith.addf %2, %4 : vector<16x128xf32>
    %cst_5 = arith.constant 0.000000e+00 : f32
    %6 = vector.broadcast %cst_5 : f32 to vector<16x128xf32>
    %7 = arith.maximumf %5, %6 : vector<16x128xf32>
    %c0_6 = arith.constant 0 : index
    %c0_7 = arith.constant 0 : index
    %8 = vector.load %arg4[%c0_6, %c0_7] : memref<16x128xf32, #tpu.memory_space<vmem>>, vector<16x128xf32>
    tpu.vector_store %arg4[%c0_6, %c0_7], %7 {strides = array<i32>} : memref<16x128xf32, #tpu.memory_space<vmem>>, vector<16x128xf32>,
    return
  }
  func.func @transform_0(%arg0: i32) -> (i32, i32) {
    %c0_i32 = arith.constant 0 : i32
    %c0_i32_0 = arith.constant 0 : i32
    %c0_i32_1 = arith.constant 0 : i32
    return %c0_i32, %c0_i32_0 : i32, i32
  }
  func.func @transform_1(%arg0: i32) -> (i32, i32) {
    %c0_i32 = arith.constant 0 : i32
    %c0_i32_0 = arith.constant 0 : i32
    return %c0_i32, %arg0 : i32, i32
  }
  func.func @transform_2(%arg0: i32) -> (i32, i32) {
    %c0_i32 = arith.constant 0 : i32
    %c0_i32_0 = arith.constant 0 : i32
    %c0_i32_1 = arith.constant 0 : i32
    return %c0_i32, %c0_i32_0 : i32, i32
  }
  func.func @transform_3(%arg0: i32) -> (i32, i32) {
    %c0_i32 = arith.constant 0 : i32
    %c0_i32_0 = arith.constant 0 : i32
    return %c0_i32, %arg0 : i32, i32
  }
}

module attributes {stable_mosaic.version = 11 : i64} {
  func.func @_gemm_bn_relu_kernel(%arg0: i32, %arg1: memref<32x144xbf16, #tpu.memory_space<vmem>>, %arg2: memref<144x128xbf16, #tpu.memory_space<vmem>>, %arg3: memref<32x1xf32, #tpu.memory_space<vmem>>, %arg4: memref<32x128xf32, #tpu.memory_space<vmem>>) attributes {dimension_semantics = [#tpu.dimension_semantics<parallel>], iteration_bounds = array<i64: 1>, scalar_prefetch = 0 : i64, scratch_operands = 0 : i64, tpu.core_type = #tpu.core_type<tc>, window_params = [{pipeline_mode = #tpu.pipeline_mode<synchronous>, transform_indices = @transform_0, window_bounds = array<i64: 32, 144>}, {transform_indices = @transform_1, window_bounds = array<i64: 144, 128>}, {pipeline_mode = #tpu.pipeline_mode<synchronous>, transform_indices = @transform_2, window_bounds = array<i64: 32, 1>}, {transform_indices = @transform_3, window_bounds = array<i64: 32, 128>}]} {
    %c0 = arith.constant 0 : index
    %c0_0 = arith.constant 0 : index
    %0 = vector.load %arg1[%c0, %c0_0] : memref<32x144xbf16, #tpu.memory_space<vmem>>, vector<32x144xbf16>
    %c0_1 = arith.constant 0 : index
    %c0_2 = arith.constant 0 : index
    %1 = vector.load %arg2[%c0_1, %c0_2] : memref<144x128xbf16, #tpu.memory_space<vmem>>, vector<144x128xbf16>
    %cst = arith.constant dense<0.000000e+00> : vector<32x128xf32>
    %2 = tpu.matmul %0, %1, %cst {dimension_numbers = #tpu.dot_dimension_numbers<[1], [0], [0], [1], [0, 0, 1, 1], [], []>} : vector<32x144xbf16>, vector<144x128xbf16>, vector<32x128xf32> -> vector<32x128xf32>
    %c0_3 = arith.constant 0 : index
    %c0_4 = arith.constant 0 : index
    %3 = vector.load %arg3[%c0_3, %c0_4] : memref<32x1xf32, #tpu.memory_space<vmem>>, vector<32x1xf32>
    %4 = vector.broadcast %3 : vector<32x1xf32> to vector<32x128xf32>
    %5 = arith.addf %2, %4 : vector<32x128xf32>
    %cst_5 = arith.constant 0.000000e+00 : f32
    %6 = vector.broadcast %cst_5 : f32 to vector<32x128xf32>
    %7 = arith.maximumf %5, %6 : vector<32x128xf32>
    %c0_6 = arith.constant 0 : index
    %c0_7 = arith.constant 0 : index
    %8 = vector.load %arg4[%c0_6, %c0_7] : memref<32x128xf32, #tpu.memory_space<vmem>>, vector<32x128xf32>
    tpu.vector_store %arg4[%c0_6, %c0_7], %7 {strides = array<i32>} : memref<32x128xf32, #tpu.memory_space<vmem>>, vector<32x128xf32>,
    return
  }
  func.func @transform_0(%arg0: i32) -> (i32, i32) {
    %c0_i32 = arith.constant 0 : i32
    %c0_i32_0 = arith.constant 0 : i32
    %c0_i32_1 = arith.constant 0 : i32
    return %c0_i32, %c0_i32_0 : i32, i32
  }
  func.func @transform_1(%arg0: i32) -> (i32, i32) {
    %c0_i32 = arith.constant 0 : i32
    %c0_i32_0 = arith.constant 0 : i32
    return %c0_i32, %arg0 : i32, i32
  }
  func.func @transform_2(%arg0: i32) -> (i32, i32) {
    %c0_i32 = arith.constant 0 : i32
    %c0_i32_0 = arith.constant 0 : i32
    %c0_i32_1 = arith.constant 0 : i32
    return %c0_i32, %c0_i32_0 : i32, i32
  }
  func.func @transform_3(%arg0: i32) -> (i32, i32) {
    %c0_i32 = arith.constant 0 : i32
    %c0_i32_0 = arith.constant 0 : i32
    return %c0_i32, %arg0 : i32, i32
  }
}

</mosaic_0001>

<llo_original>
// kernel: msdn_first_layer_forward.3
$region0: #{msdn_first_layer_forward.3}
  #allocation0 [shape = 'u32[]', space=smem, size = 0x4, offset = 0x4, fixed_abs, tag = 'smem constant byte address 0x4 - core index']
  #allocation1 [shape = 'u32[144,128]{1,0:T(1,128)}', space=vmem, size = 0x12000, scoped, tag = 'internal scratch']
  %s0 = inlined_call_operand.vmem [shape: bf16[8,40], index: 0, kind: input, shape index: {}]
  %s1 = inlined_call_operand.vmem [shape: bf16[40,512], index: 1, kind: input, shape index: {}]
  %s2 = inlined_call_operand.vmem [shape: f32[8,1], index: 2, kind: input, shape index: {}]
  %s3 = inlined_call_operand.vmem [shape: f32[8,512], index: 3, kind: output, shape index: {}]
  %s4 = sld [smem:[#allocation0]]
  $region83: #{msdn_first_layer_forward.3} parent=0
    _
  %s6 = ssub.s32 1, %s4
  %s7 = scalar_select 0, %s6, %s4
  $region1: #{msdn_first_layer_forward.3} parent=0
    #allocation2 [shape = 'u8[40960]{0}', space=vmem, size = 0xa000, scoped, tag = 'input window, operand 1']
    loop: start=0, step=1, limit=4
    $region2: #{msdn_first_layer_forward.3} parent=1 // loop_pre_header
      _
    $region3: #{msdn_first_layer_forward.3} parent=1 // loop_header
      %s9 = sphi 0, %s13
      %p10 = scmp.ge.s32.totalorder %s9, 4
      %s17 = sphi 0, %s17
      %s19 = sphi 0, %s17
      %s20 = sphi 0, %s19
      %s34 = sphi 0, %s20
      %s40 = sphi 0, %s42
      %s43 = sphi 0, %s40
      %s44 = sphi 0, %s43
      %s60 = sphi 0, %s44
      %s64 = sphi 0, %s64
      %s66 = sphi 0, %s64
      %s67 = sphi 0, %s66
      %s81 = sphi 0, %s67
      %s87 = sphi 0, %s89
      %s90 = sphi 0, %s87
      %s91 = sphi 0, %s90
      %s107 = sphi 0, %s91
    $region4: #{msdn_first_layer_forward.3} parent=1 // loop_header_branch
      %12 = sbr.rel (%p10) target = $region8
    $region5: #{msdn_first_layer_forward.3} parent=1 // loop_body
      %s14 = ssub.s32 %s9, 1
      %s15 = ssub.s32 %s9, 2
      %s16 = sadd.s32 %s9, 1
      %s18 = sadd.s32 %s17, 1
      %p21 = scmp.eq.s32.totalorder %s9, 1
      %p22 = scmp.ne.s32.totalorder %s17, %s19
      %p23 = scmp.eq.s32.totalorder %s9, 0
      %p24 = por %p22, %p23
      %p25 = scmp.ne.s32.totalorder %s17, %s19
      %p26 = scmp.eq.s32.totalorder %s14, 1
      %p27 = por %p25, %p26
      %p28 = scmp.ne.s32.totalorder %s19, %s20
      %p29 = scmp.eq.s32.totalorder %s14, 0
      %p30 = por %p28, %p29
      %p31 = scmp.ne.s32.totalorder %s19, %s20
      %p32 = scmp.eq.s32.totalorder %s15, 1
      %p33 = por %p31, %p32
      %p35 = scmp.ne.s32.totalorder %s20, %s34
      %p36 = scmp.eq.s32.totalorder %s15, 0
      %p37 = por %p35, %p36
      %s38 = ssub.s32 %s9, %s16
      %p39 = scmp.eq.s32.totalorder %s38, 0
      %s41 = sadd.s32 %s40, 1
      %s42 = scalar_select %p39, %s40, %s41
      %p45 = pneg %p39
      %p46 = scmp.eq.s32.totalorder %s9, 1
      %p47 = por %p45, %p46
      %p48 = scmp.ne.s32.totalorder %s40, %s43
      %p49 = scmp.eq.s32.totalorder %s9, 0
      %p50 = por %p48, %p49
      %p51 = scmp.ne.s32.totalorder %s40, %s43
      %p52 = scmp.eq.s32.totalorder %s14, 1
      %p53 = por %p51, %p52
      %p54 = scmp.ne.s32.totalorder %s43, %s44
      %p55 = scmp.eq.s32.totalorder %s14, 0
      %p56 = por %p54, %p55
      %p57 = scmp.ne.s32.totalorder %s43, %s44
      %p58 = scmp.eq.s32.totalorder %s15, 1
      %p59 = por %p57, %p58
      %p61 = scmp.ne.s32.totalorder %s44, %s60
      %p62 = scmp.eq.s32.totalorder %s15, 0
      %p63 = por %p61, %p62
      %s65 = sadd.s32 %s64, 1
      %p68 = scmp.eq.s32.totalorder %s9, 1
      %p69 = scmp.ne.s32.totalorder %s64, %s66
      %p70 = scmp.eq.s32.totalorder %s9, 0
      %p71 = por %p69, %p70
      %p72 = scmp.ne.s32.totalorder %s64, %s66
      %p73 = scmp.eq.s32.totalorder %s14, 1
      %p74 = por %p72, %p73
      %p75 = scmp.ne.s32.totalorder %s66, %s67
      %p76 = scmp.eq.s32.totalorder %s14, 0
      %p77 = por %p75, %p76
      %p78 = scmp.ne.s32.totalorder %s66, %s67
      %p79 = scmp.eq.s32.totalorder %s15, 1
      %p80 = por %p78, %p79
      %p82 = scmp.ne.s32.totalorder %s67, %s81
      %p83 = scmp.eq.s32.totalorder %s15, 0
      %p84 = por %p82, %p83
      %s85 = ssub.s32 %s9, %s16
      %p86 = scmp.eq.s32.totalorder %s85, 0
      %s88 = sadd.s32 %s87, 1
      %s89 = scalar_select %p86, %s87, %s88
      %p92 = pneg %p86
      %p93 = scmp.eq.s32.totalorder %s9, 1
      %p94 = por %p92, %p93
      %p95 = scmp.ne.s32.totalorder %s87, %s90
      %p96 = scmp.eq.s32.totalorder %s9, 0
      %p97 = por %p95, %p96
      %p98 = scmp.ne.s32.totalorder %s87, %s90
      %p99 = scmp.eq.s32.totalorder %s14, 1
      %p100 = por %p98, %p99
      %p101 = scmp.ne.s32.totalorder %s90, %s91
      %p102 = scmp.eq.s32.totalorder %s14, 0
      %p103 = por %p101, %p102
      %p104 = scmp.ne.s32.totalorder %s90, %s91
      %p105 = scmp.eq.s32.totalorder %s15, 1
      %p106 = por %p104, %p105
      %p108 = scmp.ne.s32.totalorder %s91, %s107
      %p109 = scmp.eq.s32.totalorder %s15, 0
      %p110 = por %p108, %p109
      %p111 = scmp.le.s32.totalorder 1, %s9
      %p112 = scmp.lt.s32.totalorder %s9, 3
      %p113 = pnand %p111, %p112
      %p114 = pneg %p113
      // Predicated region
      $region9: #{msdn_first_layer_forward.3} parent=5 // pred_check
        _
      $region10: #{msdn_first_layer_forward.3} parent=5 // pred_check_branch
        %116 = sbr.rel (%p113) target = $region12
      $region11: #{msdn_first_layer_forward.3} parent=5 // pred_region
        %s117 = ssub.s32 %s9, 1
        // Predicated region
        $region13: #{msdn_first_layer_forward.3} parent=11 // pred_check
          %p118 = pneg %p30
        $region14: #{msdn_first_layer_forward.3} parent=11 // pred_check_branch
          %120 = sbr.rel (%p118) target = $region16
        $region15: #{msdn_first_layer_forward.3} parent=11 // pred_region
          _
        $region16: #{msdn_first_layer_forward.3} parent=11 // pred_fallthru
          _
        // Predicated region
        $region17: #{msdn_first_layer_forward.3} parent=11 // pred_check
          %p121 = pneg %p77
        $region18: #{msdn_first_layer_forward.3} parent=11 // pred_check_branch
          %123 = sbr.rel (%p121) target = $region20
        $region19: #{msdn_first_layer_forward.3} parent=11 // pred_region
          _
        $region20: #{msdn_first_layer_forward.3} parent=11 // pred_fallthru
          _
      $region12: #{msdn_first_layer_forward.3} parent=5 // pred_fallthru
        _
      %p124 = scmp.lt.s32.totalorder %s9, 2
      // Predicated region
      $region21: #{msdn_first_layer_forward.3} parent=5 // pred_check
        %p125 = pneg %p124
      $region22: #{msdn_first_layer_forward.3} parent=5 // pred_check_branch
        %127 = sbr.rel (%p125) target = $region24
      $region23: #{msdn_first_layer_forward.3} parent=5 // pred_region
        // Predicated region
        $region25: #{msdn_first_layer_forward.3} parent=23 // pred_check
          %p128 = pneg %p50
        $region26: #{msdn_first_layer_forward.3} parent=23 // pred_check_branch
          %130 = sbr.rel (%p128) target = $region28
        $region27: #{msdn_first_layer_forward.3} parent=23 // pred_region
          %s131 = sand.u32 %s40, 1
          %s132 = sand.u32 %s40, 1
          %s133 = smul.addr %s132, 40
          %s134 = scalar_lea.vmem [#allocation2], %s133
          %s135 = smul.u32 2, %s9
          %s136 = smul.addr %s135, 4
          %s137 = scalar_lea.vmem %s1, %s136
          // Predicated region
          $region29: #{msdn_first_layer_forward.3} parent=27 // pred_check
            _
          $region30: #{msdn_first_layer_forward.3} parent=27 // pred_check_branch
            %139 = sbr.rel (0) target = $region32
          $region31: #{msdn_first_layer_forward.3} parent=27 // pred_region
            // Predicated region
            $region33: #{msdn_first_layer_forward.3} parent=31 // pred_check
              _
            $region34: #{msdn_first_layer_forward.3} parent=31 // pred_check_branch
              %141 = sbr.rel (0) target = $region36
            $region35: #{msdn_first_layer_forward.3} parent=31 // pred_region
              // Predicated region
              $region48: #{msdn_first_layer_forward.3} parent=35 // pred_check
                _
              $region49: #{msdn_first_layer_forward.3} parent=35 // pred_check_branch
                %164 = sbr.rel (0) target = $region51
              $region50: #{msdn_first_layer_forward.3} parent=35 // pred_region
                loop: start=0, step=1, limit=1
                $region52: #{msdn_first_layer_forward.3} parent=50 // loop_pre_header
                  _
                $region53: #{msdn_first_layer_forward.3} parent=50 // loop_header
                  %s166 = sphi 0, %s170
                  %p167 = scmp.ge.s32.totalorder %s166, 1
                  %s171 = sphi %s137, %s137
                  %s172 = sphi %s134, %s134
                $region54: #{msdn_first_layer_forward.3} parent=50 // loop_header_branch
                  %169 = sbr.rel (%p167) target = $region58
                $region55: #{msdn_first_layer_forward.3} parent=50 // loop_body
                  %v173 = vld [vmem:[%s171] sm:$0xff]
                  %174 = vst [vmem:[%s172] sm:$0xff] %v173
                  %v175 = vld [vmem:[%s171 + $0x10] sm:$0xff]
                  %176 = vst [vmem:[%s172 + $0x8] sm:$0xff] %v175
                  %v177 = vld [vmem:[%s171 + $0x20] sm:$0xff]
                  %178 = vst [vmem:[%s172 + $0x10] sm:$0xff] %v177
                  %v179 = vld [vmem:[%s171 + $0x30] sm:$0xff]
                  %180 = vst [vmem:[%s172 + $0x18] sm:$0xff] %v179
                  %v181 = vld [vmem:[%s171 + $0x40] sm:$0xff]
                  %182 = vst [vmem:[%s172 + $0x20] sm:$0xff] %v181
                $region56: #{msdn_first_layer_forward.3} parent=50 // loop_footer
                  %s170 = sadd.s32 1, %s166
                $region57: #{msdn_first_layer_forward.3} parent=50 // loop_footer_branch
                  %165 = sbr.rel target = $region53
                $region58: #{msdn_first_layer_forward.3} parent=50 // loop_exit
                  _
              $region51: #{msdn_first_layer_forward.3} parent=35 // pred_fallthru
                _
              // Predicated region
              $region59: #{msdn_first_layer_forward.3} parent=35 // pred_check
                _
              $region60: #{msdn_first_layer_forward.3} parent=35 // pred_check_branch
                %184 = sbr.rel target = $region62
              $region61: #{msdn_first_layer_forward.3} parent=35 // pred_region
                _
              $region62: #{msdn_first_layer_forward.3} parent=35 // pred_fallthru
                _
            $region36: #{msdn_first_layer_forward.3} parent=31 // pred_fallthru
              _
            // Predicated region
            $region37: #{msdn_first_layer_forward.3} parent=31 // pred_check
              _
            $region38: #{msdn_first_layer_forward.3} parent=31 // pred_check_branch
              %143 = sbr.rel target = $region40
            $region39: #{msdn_first_layer_forward.3} parent=31 // pred_region
              loop: start=0, step=1, limit=1
              $region41: #{msdn_first_layer_forward.3} parent=39 // loop_pre_header
                _
              $region42: #{msdn_first_layer_forward.3} parent=39 // loop_header
                %s146 = sphi 0, %s150
                %p147 = scmp.ge.s32.totalorder %s146, 1
                %s151 = sphi %s137, %s137
                %s152 = sphi %s134, %s134
              $region43: #{msdn_first_layer_forward.3} parent=39 // loop_header_branch
                %149 = sbr.rel (%p147) target = $region47
              $region44: #{msdn_first_layer_forward.3} parent=39 // loop_body
                %v153 = vld [vmem:[%s151] sm:$0xff]
                %154 = vst [vmem:[%s152] sm:$0xff] %v153
                %v155 = vld [vmem:[%s151 + $0x10] sm:$0xff]
                %156 = vst [vmem:[%s152 + $0x8] sm:$0xff] %v155
                %v157 = vld [vmem:[%s151 + $0x20] sm:$0xff]
                %158 = vst [vmem:[%s152 + $0x10] sm:$0xff] %v157
                %v159 = vld [vmem:[%s151 + $0x30] sm:$0xff]
                %160 = vst [vmem:[%s152 + $0x18] sm:$0xff] %v159
                %v161 = vld [vmem:[%s151 + $0x40] sm:$0xff]
                %162 = vst [vmem:[%s152 + $0x20] sm:$0xff] %v161
              $region45: #{msdn_first_layer_forward.3} parent=39 // loop_footer
                %s150 = sadd.s32 1, %s146
              $region46: #{msdn_first_layer_forward.3} parent=39 // loop_footer_branch
                %145 = sbr.rel target = $region42
              $region47: #{msdn_first_layer_forward.3} parent=39 // loop_exit
                _
            $region40: #{msdn_first_layer_forward.3} parent=31 // pred_fallthru
              _
          $region32: #{msdn_first_layer_forward.3} parent=27 // pred_fallthru
            _
          %185 = vnop
        $region28: #{msdn_first_layer_forward.3} parent=23 // pred_fallthru
          _
      $region24: #{msdn_first_layer_forward.3} parent=5 // pred_fallthru
        _
      %p186 = scmp.le.s32.totalorder 1, %s9
      %p187 = scmp.lt.s32.totalorder %s9, 3
      %p188 = pnand %p186, %p187
      %p189 = pneg %p188
      // Predicated region
      $region63: #{msdn_first_layer_forward.3} parent=5 // pred_check
        _
      $region64: #{msdn_first_layer_forward.3} parent=5 // pred_check_branch
        %191 = sbr.rel (%p188) target = $region66
      $region65: #{msdn_first_layer_forward.3} parent=5 // pred_region
        %s192 = ssub.s32 %s9, 1
        %s193 = sand.u32 %s43, 1
        %s194 = sand.u32 %s43, 1
        %s195 = smul.addr %s194, 40
        %s196 = scalar_lea.vmem [#allocation2], %s195
        // Predicated region
        $region67: #{msdn_first_layer_forward.3} parent=65 // pred_check
          %p197 = pneg %p56
        $region68: #{msdn_first_layer_forward.3} parent=65 // pred_check_branch
          %199 = sbr.rel (%p197) target = $region70
        $region69: #{msdn_first_layer_forward.3} parent=65 // pred_region
          _
        $region70: #{msdn_first_layer_forward.3} parent=65 // pred_fallthru
          _
        %p200 = pneg %p30
        %p201 = pneg %p27
        %s202 = sand.u32 %s43, 1
        %s203 = sand.u32 %s43, 1
        %s204 = smul.addr %s203, 40
        %s205 = scalar_lea.vmem [#allocation2], %s204
        %p206 = pneg %p56
        %p207 = pneg %p53
        %p208 = pneg %p77
        %p209 = pneg %p74
        %p210 = pneg %p103
        %p211 = pneg %p100
        %s212 = smul.u32 2, %s14
        %p213 = scmp.lt.s32.totalorder %s212, 3
        %s214 = scalar_select %p213, %s212, 3
        %s215 = smul.addr %s214, 8
        %s216 = scalar_lea.vmem %s3, %s215
        %s217 = smul.u32 2, %s14
        %s218 = smul.u32 2, %s14
        %p219 = scmp.lt.s32.totalorder %s218, 3
        %s220 = scalar_select %p219, %s218, 3
        %s221 = smul.addr %s220, 8
        %s222 = scalar_lea.vmem %s3, %s221
        %s223 = smul.u32 2, %s14
        %v225 = vld [vmem:[%s0] sm:$0xf]
        %v226 = vld [vmem:[%s196] sm:$0xff]
        %v227 = vld [vmem:[%s196 + $0x8] sm:$0xff]
        %v228 = vld [vmem:[%s196 + $0x10] sm:$0xff]
        %v229 = vld [vmem:[%s196 + $0x18] sm:$0xff]
        %v230 = vld [vmem:[%s196 + $0x20] sm:$0xff]
        %v231 = vld [vmem:[%s2] sm:$0xff]
        %233 = vset.pattern.permute.xlu0 0
        %234 = vperm.xlu0 %233, %v231
        %v235 = vpop.permute.xlu0 %234
        %v242 = vunpack.c.l.b16 %v226
        %v243 = vunpack.c.h.b16 %v226
        %v244 = vunpack.c.l.b16 %v227
        %v245 = vunpack.c.h.b16 %v227
        %v246 = vunpack.c.l.b16 %v228
        %v247 = vunpack.c.h.b16 %v228
        %v248 = vunpack.c.l.b16 %v229
        %v249 = vunpack.c.h.b16 %v229
        %v250 = vunpack.c.l.b16 %v230
        %v251 = vunpack.c.h.b16 %v230
        %v252 = vpack.c.b16 %v244, %v242
        %v253 = vpack.c.b16 %v245, %v243
        %v254 = vpack.c.b16 %v248, %v246
        %v255 = vpack.c.b16 %v249, %v247
        %v256 = vpack.c.b16 %v250, %v250
        %v257 = vpack.c.b16 %v251, %v251
        %vm262 = vcmask 326656
        %v264 = vsel %vm262, %v225, 0
        %vm266 = vcmask 1043456
        %v268 = vsel %vm266, %v256, 0
        %v271 = vsel %vm266, %v257, 0
        %273 = vmatprep.subr.bf16.mxu0 %v253
        %274 = vmatpush1.bf16.msra.mxu0 %v252
        %275 = vmatprep.subr.bf16.mxu0 %v255
        %276 = vmatpush1.bf16.msra.mxu0 %v254
        %277 = vmatprep.subr.bf16.mxu0 %v271
        %278 = vmatpush1.bf16.msra.mxu0 %v268
        %279 = vmatprep.subr.bf16.mxu0 0
        %280 = vmatpush1.bf16.msra.mxu0 0
        %281 = vmatprep.subr.bf16.mxu0 0
        %282 = vmatpush1.bf16.msra.mxu0 0
        %283 = vmatprep.subr.bf16.mxu0 0
        %284 = vmatpush1.bf16.msra.mxu0 0
        %285 = vmatprep.subr.bf16.mxu0 0
        %286 = vmatpush1.bf16.msra.mxu0 0
        %287 = vmatprep.subr.bf16.mxu0 0
        %288 = vmatpush1.bf16.msra.mxu0 0
        %289 = vmatprep.subr.bf16.mxu0 0
        %290 = vmatpush1.bf16.msra.mxu0 0
        %291 = vmatprep.subr.bf16.mxu0 0
        %292 = vmatpush1.bf16.msra.mxu0 0
        %293 = vmatprep.subr.bf16.mxu0 0
        %294 = vmatpush1.bf16.msra.mxu0 0
        %295 = vmatprep.subr.bf16.mxu0 0
        %296 = vmatpush1.bf16.msra.mxu0 0
        %297 = vmatprep.subr.bf16.mxu0 0
        %298 = vmatpush1.bf16.msra.mxu0 0
        %299 = vmatprep.subr.bf16.mxu0 0
        %300 = vmatpush1.bf16.msra.mxu0 0
        %301 = vmatprep.subr.bf16.mxu0 0
        %302 = vmatpush1.bf16.msra.mxu0 0
        %303 = vmatprep.subr.bf16.mxu0 0
        %304 = vmatpush1.bf16.msra.mxu0 0
        %305 = vmatprep.mubr.bf16.mxu0 0
        %306 = vmatmul.mubr.bf16.gmra.mrb[0].mxu0 %v264
        %v307 = vpop.f32.mrb[0].mxu0
        %v308 = vadd.f32 %v235, %v307
        %v309 = vpop.f32.mrb[0].mxu0
        %v310 = vadd.f32 %v235, %v309
        %v311 = vpop.f32.mrb[0].mxu0
        %v312 = vpop.f32.mrb[0].mxu0
        %313 = vdwg.mxu0
        %v314 = vmax.f32 %v308, 0.0
        %v315 = vmax.f32 %v310, 0.0
        %316 = vst [vmem:[%s222] sm:$0xff] %v314
        %317 = vst [vmem:[%s222 + $0x8] sm:$0xff] %v315
        %s318 = smul.u32 2, %s14
        %p319 = scmp.lt.s32.totalorder %s318, 3
        %s320 = scalar_select %p319, %s318, 3
        %s321 = smul.addr %s320, 8
        %s322 = scalar_lea.vmem %s3, %s321
        // Predicated region
        $region71: #{msdn_first_layer_forward.3} parent=65 // pred_check
          %p323 = pneg %p100
        $region72: #{msdn_first_layer_forward.3} parent=65 // pred_check_branch
          %325 = sbr.rel (%p323) target = $region74
        $region73: #{msdn_first_layer_forward.3} parent=65 // pred_region
          %s326 = smul.u32 2, %s14
        $region74: #{msdn_first_layer_forward.3} parent=65 // pred_fallthru
          _
      $region66: #{msdn_first_layer_forward.3} parent=5 // pred_fallthru
        _
      %p327 = scmp.le.s32.totalorder 2, %s9
      // Predicated region
      $region75: #{msdn_first_layer_forward.3} parent=5 // pred_check
        %p328 = pneg %p327
      $region76: #{msdn_first_layer_forward.3} parent=5 // pred_check_branch
        %330 = sbr.rel (%p328) target = $region78
      $region77: #{msdn_first_layer_forward.3} parent=5 // pred_region
        %s331 = ssub.s32 %s9, 2
        // Predicated region
        $region79: #{msdn_first_layer_forward.3} parent=77 // pred_check
          %p332 = pneg %p106
        $region80: #{msdn_first_layer_forward.3} parent=77 // pred_check_branch
          %334 = sbr.rel (%p332) target = $region82
        $region81: #{msdn_first_layer_forward.3} parent=77 // pred_region
          %s335 = smul.u32 2, %s15
          %p336 = scmp.lt.s32.totalorder %s335, 3
          %s337 = scalar_select %p336, %s335, 3
          %s338 = smul.addr %s337, 8
          %s339 = scalar_lea.vmem %s3, %s338
        $region82: #{msdn_first_layer_forward.3} parent=77 // pred_fallthru
          _
      $region78: #{msdn_first_layer_forward.3} parent=5 // pred_fallthru
        _
    $region6: #{msdn_first_layer_forward.3} parent=1 // loop_footer
      %s13 = sadd.s32 1, %s9
    $region7: #{msdn_first_layer_forward.3} parent=1 // loop_footer_branch
      %8 = sbr.rel target = $region3
    $region8: #{msdn_first_layer_forward.3} parent=1 // loop_exit
      _

// kernel: msdn_first_layer_forward.4
$region0: #{msdn_first_layer_forward.4}
  #allocation0 [shape = 'u32[]', space=smem, size = 0x4, offset = 0x4, fixed_abs, tag = 'smem constant byte address 0x4 - core index']
  #allocation1 [shape = 'u32[144,128]{1,0:T(1,128)}', space=vmem, size = 0x12000, scoped, tag = 'internal scratch']
  %s0 = inlined_call_operand.vmem [shape: bf16[16,72], index: 0, kind: input, shape index: {}]
  %s1 = inlined_call_operand.vmem [shape: bf16[72,128], index: 1, kind: input, shape index: {}]
  %s2 = inlined_call_operand.vmem [shape: f32[16,1], index: 2, kind: input, shape index: {}]
  %s3 = inlined_call_operand.vmem [shape: f32[16,128], index: 3, kind: output, shape index: {}]
  %s4 = sld [smem:[#allocation0]]
  $region22: #{msdn_first_layer_forward.4} parent=0
    _
  %s6 = ssub.s32 1, %s4
  %s7 = scalar_select 0, %s6, %s4
  // Predicated region
  $region2: #{msdn_first_layer_forward.4} parent=0 // pred_check
    _
  $region3: #{msdn_first_layer_forward.4} parent=0 // pred_check_branch
    %9 = sbr.rel (0) target = $region5
  $region4: #{msdn_first_layer_forward.4} parent=0 // pred_region
    _
  $region5: #{msdn_first_layer_forward.4} parent=0 // pred_fallthru
    _
  // Predicated region
  $region6: #{msdn_first_layer_forward.4} parent=0 // pred_check
    _
  $region7: #{msdn_first_layer_forward.4} parent=0 // pred_check_branch
    %11 = sbr.rel (0) target = $region9
  $region8: #{msdn_first_layer_forward.4} parent=0 // pred_region
    _
  $region9: #{msdn_first_layer_forward.4} parent=0 // pred_fallthru
    _
  // Predicated region
  $region10: #{msdn_first_layer_forward.4} parent=0 // pred_check
    _
  $region11: #{msdn_first_layer_forward.4} parent=0 // pred_check_branch
    %13 = sbr.rel (0) target = $region13
  $region12: #{msdn_first_layer_forward.4} parent=0 // pred_region
    _
  $region13: #{msdn_first_layer_forward.4} parent=0 // pred_fallthru
    _
  %v15 = vld [vmem:[%s0] sm:$0xf]
  %v16 = vld [vmem:[%s0 + $0x4] sm:$0xf]
  %v17 = vld [vmem:[%s1] sm:$0xf]
  %v18 = vld [vmem:[%s1 + $0x4] sm:$0xf]
  %v19 = vld [vmem:[%s1 + $0x8] sm:$0xf]
  %v20 = vld [vmem:[%s1 + $0xc] sm:$0xf]
  %v21 = vld [vmem:[%s1 + $0x10] sm:$0xf]
  %v22 = vld [vmem:[%s1 + $0x14] sm:$0xf]
  %v23 = vld [vmem:[%s1 + $0x18] sm:$0xf]
  %v24 = vld [vmem:[%s1 + $0x1c] sm:$0xf]
  %v25 = vld [vmem:[%s1 + $0x20] sm:$0xf]
  %v26 = vld [vmem:[%s2] sm:$0xff]
  %v27 = vld [vmem:[%s2 + $0x8] sm:$0xff]
  %29 = vset.pattern.permute.xlu0 0
  %30 = vperm.xlu0 %29, %v26
  %v31 = vpop.permute.xlu0 %30
  %34 = vset.pattern.permute.xlu0 0
  %35 = vperm.xlu0 %34, %v27
  %v36 = vpop.permute.xlu0 %35
  %v40 = vunpack.c.l.b16 %v15
  %v41 = vunpack.c.l.b16 %v16
  %v42 = vpack.c.b16 %v41, %v40
  %v52 = vunpack.c.l.b16 %v17
  %v53 = vunpack.c.l.b16 %v18
  %v54 = vunpack.c.l.b16 %v19
  %v55 = vunpack.c.l.b16 %v20
  %v56 = vunpack.c.l.b16 %v21
  %v57 = vunpack.c.l.b16 %v22
  %v58 = vunpack.c.l.b16 %v23
  %v59 = vunpack.c.l.b16 %v24
  %v60 = vunpack.c.l.b16 %v25
  %v61 = vpack.c.b16 %v53, %v52
  %v62 = vpack.c.b16 %v55, %v54
  %v63 = vpack.c.b16 %v57, %v56
  %v64 = vpack.c.b16 %v59, %v58
  %v65 = vpack.c.b16 %v60, %v60
  %vm70 = vcmask 588800
  %v72 = vsel %vm70, %v42, 0
  %vm74 = vcmask 1043456
  %v76 = vsel %vm74, %v65, 0
  %78 = vmatprep.subr.bf16.mxu0 0
  %79 = vmatpush1.bf16.msra.mxu0 %v61
  %80 = vmatprep.subr.bf16.mxu0 0
  %81 = vmatpush1.bf16.msra.mxu0 %v62
  %82 = vmatprep.subr.bf16.mxu0 0
  %83 = vmatpush1.bf16.msra.mxu0 %v63
  %84 = vmatprep.subr.bf16.mxu0 0
  %85 = vmatpush1.bf16.msra.mxu0 %v64
  %86 = vmatprep.subr.bf16.mxu0 0
  %87 = vmatpush1.bf16.msra.mxu0 %v76
  %88 = vmatprep.subr.bf16.mxu0 0
  %89 = vmatpush1.bf16.msra.mxu0 0
  %90 = vmatprep.subr.bf16.mxu0 0
  %91 = vmatpush1.bf16.msra.mxu0 0
  %92 = vmatprep.subr.bf16.mxu0 0
  %93 = vmatpush1.bf16.msra.mxu0 0
  %94 = vmatprep.subr.bf16.mxu0 0
  %95 = vmatpush1.bf16.msra.mxu0 0
  %96 = vmatprep.subr.bf16.mxu0 0
  %97 = vmatpush1.bf16.msra.mxu0 0
  %98 = vmatprep.subr.bf16.mxu0 0
  %99 = vmatpush1.bf16.msra.mxu0 0
  %100 = vmatprep.subr.bf16.mxu0 0
  %101 = vmatpush1.bf16.msra.mxu0 0
  %102 = vmatprep.subr.bf16.mxu0 0
  %103 = vmatpush1.bf16.msra.mxu0 0
  %104 = vmatprep.subr.bf16.mxu0 0
  %105 = vmatpush1.bf16.msra.mxu0 0
  %106 = vmatprep.subr.bf16.mxu0 0
  %107 = vmatpush1.bf16.msra.mxu0 0
  %108 = vmatprep.subr.bf16.mxu0 0
  %109 = vmatpush1.bf16.msra.mxu0 0
  %110 = vmatprep.mubr.bf16.mxu0 0
  %111 = vmatmul.mubr.bf16.gmra.mrb[0].mxu0 %v72
  %v112 = vpop.f32.mrb[0].mxu0
  %v113 = vadd.f32 %v31, %v112
  %v114 = vpop.f32.mrb[0].mxu0
  %v115 = vpop.f32.mrb[0].mxu0
  %v116 = vadd.f32 %v36, %v115
  %v117 = vpop.f32.mrb[0].mxu0
  %118 = vdwg.mxu0
  %v119 = vmax.f32 %v113, 0.0
  %v120 = vmax.f32 %v116, 0.0
  %121 = vst [vmem:[%s3] sm:$0xff] %v119
  %122 = vst [vmem:[%s3 + $0x8] sm:$0xff] %v120
  // Predicated region
  $region14: #{msdn_first_layer_forward.4} parent=0 // pred_check
    _
  $region15: #{msdn_first_layer_forward.4} parent=0 // pred_check_branch
    %124 = sbr.rel (0) target = $region17
  $region16: #{msdn_first_layer_forward.4} parent=0 // pred_region
    _
  $region17: #{msdn_first_layer_forward.4} parent=0 // pred_fallthru
    _
  // Predicated region
  $region18: #{msdn_first_layer_forward.4} parent=0 // pred_check
    _
  $region19: #{msdn_first_layer_forward.4} parent=0 // pred_check_branch
    %126 = sbr.rel (0) target = $region21
  $region20: #{msdn_first_layer_forward.4} parent=0 // pred_region
    _
  $region21: #{msdn_first_layer_forward.4} parent=0 // pred_fallthru
    _

// kernel: msdn_first_layer_forward.5
$region0: #{msdn_first_layer_forward.5}
  #allocation0 [shape = 'u32[]', space=smem, size = 0x4, offset = 0x4, fixed_abs, tag = 'smem constant byte address 0x4 - core index']
  #allocation1 [shape = 'u32[144,128]{1,0:T(1,128)}', space=vmem, size = 0x12000, scoped, tag = 'internal scratch']
  %s0 = inlined_call_operand.vmem [shape: bf16[32,144], index: 0, kind: input, shape index: {}]
  %s1 = inlined_call_operand.vmem [shape: bf16[144,128], index: 1, kind: input, shape index: {}]
  %s2 = inlined_call_operand.vmem [shape: f32[32,1], index: 2, kind: input, shape index: {}]
  %s3 = inlined_call_operand.vmem [shape: f32[32,128], index: 3, kind: output, shape index: {}]
  %s4 = sld [smem:[#allocation0]]
  $region22: #{msdn_first_layer_forward.5} parent=0
    _
  %s6 = ssub.s32 1, %s4
  %s7 = scalar_select 0, %s6, %s4
  // Predicated region
  $region2: #{msdn_first_layer_forward.5} parent=0 // pred_check
    _
  $region3: #{msdn_first_layer_forward.5} parent=0 // pred_check_branch
    %9 = sbr.rel (0) target = $region5
  $region4: #{msdn_first_layer_forward.5} parent=0 // pred_region
    _
  $region5: #{msdn_first_layer_forward.5} parent=0 // pred_fallthru
    _
  // Predicated region
  $region6: #{msdn_first_layer_forward.5} parent=0 // pred_check
    _
  $region7: #{msdn_first_layer_forward.5} parent=0 // pred_check_branch
    %11 = sbr.rel (0) target = $region9
  $region8: #{msdn_first_layer_forward.5} parent=0 // pred_region
    _
  $region9: #{msdn_first_layer_forward.5} parent=0 // pred_fallthru
    _
  // Predicated region
  $region10: #{msdn_first_layer_forward.5} parent=0 // pred_check
    _
  $region11: #{msdn_first_layer_forward.5} parent=0 // pred_check_branch
    %13 = sbr.rel (0) target = $region13
  $region12: #{msdn_first_layer_forward.5} parent=0 // pred_region
    _
  $region13: #{msdn_first_layer_forward.5} parent=0 // pred_fallthru
    _
  %v15 = vld [vmem:[%s0] sm:$0xff]
  %v16 = vld [vmem:[%s0 + $0x8] sm:$0xff]
  %v17 = vld [vmem:[%s0 + $0x10] sm:$0xff]
  %v18 = vld [vmem:[%s0 + $0x18] sm:$0xff]
  %v19 = vld [vmem:[%s1] sm:$0xf]
  %v20 = vld [vmem:[%s1 + $0x4] sm:$0xf]
  %v21 = vld [vmem:[%s1 + $0x8] sm:$0xf]
  %v22 = vld [vmem:[%s1 + $0xc] sm:$0xf]
  %v23 = vld [vmem:[%s1 + $0x10] sm:$0xf]
  %v24 = vld [vmem:[%s1 + $0x14] sm:$0xf]
  %v25 = vld [vmem:[%s1 + $0x18] sm:$0xf]
  %v26 = vld [vmem:[%s1 + $0x1c] sm:$0xf]
  %v27 = vld [vmem:[%s1 + $0x20] sm:$0xf]
  %v28 = vld [vmem:[%s1 + $0x24] sm:$0xf]
  %v29 = vld [vmem:[%s1 + $0x28] sm:$0xf]
  %v30 = vld [vmem:[%s1 + $0x2c] sm:$0xf]
  %v31 = vld [vmem:[%s1 + $0x30] sm:$0xf]
  %v32 = vld [vmem:[%s1 + $0x34] sm:$0xf]
  %v33 = vld [vmem:[%s1 + $0x38] sm:$0xf]
  %v34 = vld [vmem:[%s1 + $0x3c] sm:$0xf]
  %v35 = vld [vmem:[%s1 + $0x40] sm:$0xf]
  %v36 = vld [vmem:[%s1 + $0x44] sm:$0xf]
  %v37 = vld [vmem:[%s2] sm:$0xff]
  %v38 = vld [vmem:[%s2 + $0x8] sm:$0xff]
  %v39 = vld [vmem:[%s2 + $0x10] sm:$0xff]
  %v40 = vld [vmem:[%s2 + $0x18] sm:$0xff]
  %42 = vset.pattern.permute.xlu0 0
  %43 = vperm.xlu0 %42, %v37
  %v44 = vpop.permute.xlu0 %43
  %47 = vset.pattern.permute.xlu0 0
  %48 = vperm.xlu0 %47, %v38
  %v49 = vpop.permute.xlu0 %48
  %52 = vset.pattern.permute.xlu0 0
  %53 = vperm.xlu0 %52, %v39
  %v54 = vpop.permute.xlu0 %53
  %57 = vset.pattern.permute.xlu0 0
  %58 = vperm.xlu0 %57, %v40
  %v59 = vpop.permute.xlu0 %58
  %v65 = vunpack.c.l.b16 %v15
  %v66 = vunpack.c.h.b16 %v15
  %v67 = vunpack.c.l.b16 %v16
  %v68 = vunpack.c.h.b16 %v16
  %v69 = vunpack.c.l.b16 %v17
  %v70 = vunpack.c.h.b16 %v17
  %v71 = vunpack.c.l.b16 %v18
  %v72 = vunpack.c.h.b16 %v18
  %v73 = vpack.c.b16 %v67, %v65
  %v74 = vpack.c.b16 %v68, %v66
  %v75 = vpack.c.b16 %v71, %v69
  %v76 = vpack.c.b16 %v72, %v70
  %v97 = vunpack.c.l.b16 %v19
  %v98 = vunpack.c.l.b16 %v20
  %v99 = vunpack.c.l.b16 %v21
  %v100 = vunpack.c.l.b16 %v22
  %v101 = vunpack.c.l.b16 %v23
  %v102 = vunpack.c.l.b16 %v24
  %v103 = vunpack.c.l.b16 %v25
  %v104 = vunpack.c.l.b16 %v26
  %v105 = vunpack.c.l.b16 %v27
  %v106 = vunpack.c.l.b16 %v28
  %v107 = vunpack.c.l.b16 %v29
  %v108 = vunpack.c.l.b16 %v30
  %v109 = vunpack.c.l.b16 %v31
  %v110 = vunpack.c.l.b16 %v32
  %v111 = vunpack.c.l.b16 %v33
  %v112 = vunpack.c.l.b16 %v34
  %v113 = vunpack.c.l.b16 %v35
  %v114 = vunpack.c.l.b16 %v36
  %v115 = vpack.c.b16 %v98, %v97
  %v116 = vpack.c.b16 %v100, %v99
  %v117 = vpack.c.b16 %v102, %v101
  %v118 = vpack.c.b16 %v104, %v103
  %v119 = vpack.c.b16 %v106, %v105
  %v120 = vpack.c.b16 %v108, %v107
  %v121 = vpack.c.b16 %v110, %v109
  %v122 = vpack.c.b16 %v112, %v111
  %v123 = vpack.c.b16 %v114, %v113
  %vm133 = vcmask 130048
  %v135 = vsel %vm133, %v74, 0
  %v138 = vsel %vm133, %v76, 0
  %140 = vmatprep.subr.bf16.mxu0 0
  %141 = vmatpush1.bf16.msra.mxu0 %v115
  %142 = vmatprep.subr.bf16.mxu0 0
  %143 = vmatpush1.bf16.msra.mxu0 %v116
  %144 = vmatprep.subr.bf16.mxu0 0
  %145 = vmatpush1.bf16.msra.mxu0 %v117
  %146 = vmatprep.subr.bf16.mxu0 0
  %147 = vmatpush1.bf16.msra.mxu0 %v118
  %148 = vmatprep.subr.bf16.mxu0 0
  %149 = vmatpush1.bf16.msra.mxu0 %v119
  %150 = vmatprep.subr.bf16.mxu0 0
  %151 = vmatpush1.bf16.msra.mxu0 %v120
  %152 = vmatprep.subr.bf16.mxu0 0
  %153 = vmatpush1.bf16.msra.mxu0 %v121
  %154 = vmatprep.subr.bf16.mxu0 0
  %155 = vmatpush1.bf16.msra.mxu0 %v122
  %156 = vmatprep.subr.bf16.mxu0 0
  %157 = vmatpush1.bf16.msra.mxu0 %v123
  %158 = vmatprep.subr.bf16.mxu0 0
  %159 = vmatpush1.bf16.msra.mxu0 0
  %160 = vmatprep.subr.bf16.mxu0 0
  %161 = vmatpush1.bf16.msra.mxu0 0
  %162 = vmatprep.subr.bf16.mxu0 0
  %163 = vmatpush1.bf16.msra.mxu0 0
  %164 = vmatprep.subr.bf16.mxu0 0
  %165 = vmatpush1.bf16.msra.mxu0 0
  %166 = vmatprep.subr.bf16.mxu0 0
  %167 = vmatpush1.bf16.msra.mxu0 0
  %168 = vmatprep.subr.bf16.mxu0 0
  %169 = vmatpush1.bf16.msra.mxu0 0
  %170 = vmatprep.subr.bf16.mxu0 0
  %171 = vmatpush1.bf16.msra.mxu0 0
  %172 = vmatprep.mubr.bf16.mxu0 %v135
  %173 = vmatmul.mubr.bf16.gmra.mrb[0].mxu0 %v73
  %v174 = vpop.f32.mrb[0].mxu0
  %v175 = vadd.f32 %v44, %v174
  %v176 = vpop.f32.mrb[0].mxu0
  %v177 = vpop.f32.mrb[0].mxu0
  %v178 = vadd.f32 %v49, %v177
  %v179 = vpop.f32.mrb[0].mxu0
  %180 = vmatprep.mubr.bf16.mxu0 %v138
  %181 = vmatmul.mubr.bf16.gmra.mrb[0].mxu0 %v75
  %v182 = vpop.f32.mrb[0].mxu0
  %v183 = vadd.f32 %v54, %v182
  %v184 = vpop.f32.mrb[0].mxu0
  %v185 = vpop.f32.mrb[0].mxu0
  %v186 = vadd.f32 %v59, %v185
  %v187 = vpop.f32.mrb[0].mxu0
  %188 = vdwg.mxu0
  %v189 = vmax.f32 %v175, 0.0
  %v190 = vmax.f32 %v178, 0.0
  %v191 = vmax.f32 %v183, 0.0
  %v192 = vmax.f32 %v186, 0.0
  %193 = vst [vmem:[%s3] sm:$0xff] %v189
  %194 = vst [vmem:[%s3 + $0x8] sm:$0xff] %v190
  %195 = vst [vmem:[%s3 + $0x10] sm:$0xff] %v191
  %196 = vst [vmem:[%s3 + $0x18] sm:$0xff] %v192
  // Predicated region
  $region14: #{msdn_first_layer_forward.5} parent=0 // pred_check
    _
  $region15: #{msdn_first_layer_forward.5} parent=0 // pred_check_branch
    %198 = sbr.rel (0) target = $region17
  $region16: #{msdn_first_layer_forward.5} parent=0 // pred_region
    _
  $region17: #{msdn_first_layer_forward.5} parent=0 // pred_fallthru
    _
  // Predicated region
  $region18: #{msdn_first_layer_forward.5} parent=0 // pred_check
    _
  $region19: #{msdn_first_layer_forward.5} parent=0 // pred_check_branch
    %200 = sbr.rel (0) target = $region21
  $region20: #{msdn_first_layer_forward.5} parent=0 // pred_region
    _
  $region21: #{msdn_first_layer_forward.5} parent=0 // pred_fallthru
    _

</llo_original>
